<compile_context>
chip_gen: v6e
topology: v6e:2x2x1
jax: 0.10.0
libtpu: 0.0.40
codegen_flags: <defaults>
</compile_context>

<pallas_src>
import functools

import jax
import jax.numpy as jnp
from jax.experimental import pallas as pl
from jax.experimental.pallas import tpu as pltpu

_LANE = 128  # vreg lane width (last-dim granularity)


def _round_up(x, m):
    return ((x + m - 1) // m) * m


def _sublane_granularity(*dtypes):
    """Second-minor tiling granularity: 8 rows for 32-bit, 16 for bf16, 32 for 8-bit."""
    g = 8
    for dt in dtypes:
        g = max(g, 32 // max(jnp.dtype(dt).itemsize, 1))
    return g


@functools.lru_cache(maxsize=1)
def _vmem_budget_bytes():
    """~75% of per-core VMEM: ~48 MiB on v7x, ~96 MiB on v5e/v6e (conservative fallback)."""
    cap = 64 * 1024 * 1024
    try:
        info = pltpu.get_tpu_info()
        cap = int(getattr(info, "vmem_capacity_bytes", cap)) or cap
    except Exception:
        pass
    budget = (cap * 3) // 4
    return max(min(budget, 112 * 1024 * 1024), 32 * 1024 * 1024)


def _decoder_kernel(x_ref, w_ref, b_ref, o_ref):
    # x_ref: (TILE_M, D) in the activation's native dtype.  Cast to the param
    # (MXU) dtype here, in VMEM, so the wrapper never round-trips x through HBM.
    x = x_ref[...].astype(w_ref.dtype)
    w = w_ref[...]
    b = b_ref[...].astype(jnp.float32)

    # Linear on the MXU with f32 accumulation.
    logits = jnp.dot(x, w, preferred_element_type=jnp.float32) + b

    # Numerically-stable log_softmax along the last (lane) axis.  Padded
    # columns carry bias -1e30 and zero weights -> exp underflows to exactly 0,
    # so they never perturb the max or the logsumexp of the real columns.
    m = jnp.max(logits, axis=-1, keepdims=True)
    shifted = logits - m
    lse = jnp.log(jnp.sum(jnp.exp(shifted), axis=-1, keepdims=True))
    o_ref[...] = (shifted - lse).astype(o_ref.dtype)


def prepare_decoder_params(weight, bias, param_dtype=jnp.bfloat16):
    """One-time parameter prep (amortized over forward calls).

    weight: (tag_nums, input_size) -- PyTorch nn.Linear layout
    bias:   (tag_nums,)
    Returns (w_t_padded (D, T_pad) in param_dtype, bias_padded (1, T_pad) f32, tag_nums).
    Bias stays f32 regardless of param_dtype (it is added post-matmul in f32).
    """
    tag_nums, _ = weight.shape
    t_pad = _round_up(tag_nums, _LANE)

    w_t = jnp.asarray(weight, param_dtype).T            # (D, T)
    b = jnp.asarray(bias, jnp.float32)
    if t_pad != tag_nums:
        w_t = jnp.pad(w_t, ((0, 0), (0, t_pad - tag_nums)))
        # Large finite negative (not -inf) keeps the softmax math NaN-free.
        b = jnp.pad(b, (0, t_pad - tag_nums), constant_values=-1e30)
    return w_t, b.reshape(1, t_pad), tag_nums


@functools.partial(
    jax.jit,
    static_argnames=("tag_nums", "tile", "m_pad", "vmem_limit", "out_dtype",
                     "buffered_params"),
)
def _decoder_forward_impl(x, w_t, b_row, *, tag_nums, tile, m_pad, vmem_limit,
                          out_dtype, buffered_params):
    input_size, t_pad = w_t.shape
    lead = x.shape[:-1]

    x2d = x.reshape(-1, input_size)            # native dtype; cast happens in-kernel
    m_rows = x2d.shape[0]
    if m_pad != m_rows:
        x2d = jnp.pad(x2d, ((0, m_pad - m_rows), (0, 0)))

    grid = (m_pad // tile,)

    x_bytes = jnp.dtype(x2d.dtype).itemsize
    w_bytes = jnp.dtype(w_t.dtype).itemsize
    o_bytes = jnp.dtype(out_dtype).itemsize
    cost = pl.CostEstimate(
        flops=2 * m_pad * input_size * t_pad,
        transcendentals=m_pad * t_pad,
        bytes_accessed=(m_pad * input_size * x_bytes
                        + input_size * t_pad * w_bytes
                        + t_pad * 4
                        + m_pad * t_pad * o_bytes),
    )

    # Resident params: constant index map.  With Buffered(1) only one pipeline
    # buffer is allocated (the second would never be used), halving their VMEM.
    if buffered_params:
        w_spec = pl.BlockSpec((input_size, t_pad), lambda i: (0, 0),
                              pipeline_mode=pl.Buffered(1))
        b_spec = pl.BlockSpec((1, t_pad), lambda i: (0, 0),
                              pipeline_mode=pl.Buffered(1))
    else:
        w_spec = pl.BlockSpec((input_size, t_pad), lambda i: (0, 0))
        b_spec = pl.BlockSpec((1, t_pad), lambda i: (0, 0))

    out = pl.pallas_call(
        _decoder_kernel,
        out_shape=jax.ShapeDtypeStruct((m_pad, t_pad), out_dtype),
        grid_spec=pltpu.PrefetchScalarGridSpec(
            num_scalar_prefetch=0,
            grid=grid,
            in_specs=[
                pl.BlockSpec((tile, input_size), lambda i: (i, 0)),  # streamed rows
                w_spec,                                              # VMEM-resident
                b_spec,                                              # VMEM-resident
            ],
            out_specs=pl.BlockSpec((tile, t_pad), lambda i: (i, 0)),  # streamed rows
        ),
        compiler_params=pltpu.CompilerParams(
            dimension_semantics=("parallel",),   # independent row tiles (v7x 2 TCs)
            vmem_limit_bytes=int(vmem_limit),
        ),
        cost_estimate=cost,
    )(x2d, w_t, b_row)

    # Static no-op checks: only slice (an HBM copy) when padding actually exists.
    if m_pad != m_rows:
        out = out[:m_rows]
    if t_pad != tag_nums:
        out = out[:, :tag_nums]
    return out.reshape(*lead, tag_nums)


_BUFFERED_PARAMS_OK = None  # cached probe: does this jax build accept pl.Buffered(1)?


def decoder_forward(x, w_t, b_row, tag_nums, *, tile_m=512, out_dtype=jnp.float32):
    """y = log_softmax(x @ W^T + b, axis=-1).

    x:     (..., input_size), any float dtype (cast to param dtype inside the kernel)
    w_t:   (input_size, T_pad) from prepare_decoder_params
    b_row: (1, T_pad) f32 from prepare_decoder_params
    out_dtype: jnp.float32 (default) or jnp.bfloat16 (halves output HBM traffic,
               log-prob precision drops to bf16).
    """
    global _BUFFERED_PARAMS_OK

    input_size, t_pad = w_t.shape
    m_rows = 1
    for d in x.shape[:-1]:
        m_rows *= int(d)
    m_rows = max(m_rows, 1)

    x_bytes = jnp.dtype(x.dtype).itemsize
    w_bytes = jnp.dtype(w_t.dtype).itemsize
    o_bytes = jnp.dtype(out_dtype).itemsize
    gran = _sublane_granularity(x.dtype, out_dtype, w_t.dtype)

    # --- Generation-aware VMEM budget & tile sizing ---------------------------
    budget = _vmem_budget_bytes()
    resident = input_size * t_pad * w_bytes + t_pad * 4            # W + bias (1 buf)
    # Per tile row: double-buffered x and out blocks + ~3 f32 temporaries
    # (logits / shifted / exp) produced inside the kernel body.
    per_row = 2 * input_size * x_bytes + 2 * t_pad * o_bytes + 3 * t_pad * 4
    tile_cap = max((budget - resident) // per_row, gran)
    tile = max((min(tile_m, tile_cap) // gran) * gran, gran)

    # --- Ragged M: minimize padded rows; keep >=2 tiles so both v7x TCs work --
    num_tiles = max(pl.cdiv(m_rows, tile), 1)
    if num_tiles == 1 and m_rows >= 2 * gran:
        num_tiles = 2
    tile = _round_up(pl.cdiv(m_rows, num_tiles), gran)
    m_pad = num_tiles * tile

    kwargs = dict(tag_nums=tag_nums, tile=tile, m_pad=m_pad,
                  vmem_limit=budget, out_dtype=out_dtype)

    if _BUFFERED_PARAMS_OK is None:
        try:
            out = _decoder_forward_impl(x, w_t, b_row, buffered_params=True, **kwargs)
            _BUFFERED_PARAMS_OK = True
            return out
        except Exception:
            # This jax build rejected pipeline_mode=pl.Buffered(1); fall back once.
            _BUFFERED_PARAMS_OK = False
    return _decoder_forward_impl(x, w_t, b_row,
                                 buffered_params=_BUFFERED_PARAMS_OK, **kwargs)


if __name__ == "__main__":
    key = jax.random.PRNGKey(0)
    k_x, k_w, k_b, k_x2 = jax.random.split(key, 4)

    batch, seq, input_size, tag_nums = 2, 8, 32, 16

    x = jax.random.normal(k_x, (batch, seq, input_size), dtype=jnp.float32)
    # Deterministic synthetic parameters (nn.Linear(input_size, tag_nums) shapes).
    weight = jax.random.normal(k_w, (tag_nums, input_size), dtype=jnp.float32) * 0.1
    bias = jax.random.normal(k_b, (tag_nums,), dtype=jnp.float32) * 0.1

    # Reference (same math as torch.log_softmax(Linear(x), dim=-1)).
    y_ref = jax.nn.log_softmax(x @ weight.T + bias, axis=-1)

    # --- 1) f32 params: tight-tolerance correctness check --------------------
    w_t32, b_row32, t = prepare_decoder_params(weight, bias, param_dtype=jnp.float32)
    y = decoder_forward(x, w_t32, b_row32, t)
    jax.block_until_ready(y)
    assert y.shape == (batch, seq, tag_nums)
    assert jnp.allclose(y, y_ref, atol=1e-5, rtol=1e-5), "mismatch vs reference (f32)"

    # --- 2) bf16 params (new default): f32 accumulation, looser tolerance ----
    w_tbf, b_rowbf, _ = prepare_decoder_params(weight, bias)  # bf16 default
    y_bf = decoder_forward(x, w_tbf, b_rowbf, t)
    jax.block_until_ready(y_bf)
    assert y_bf.shape == (batch, seq, tag_nums)
    assert jnp.allclose(y_bf, y_ref, atol=5e-2, rtol=5e-2), "mismatch vs reference (bf16 params)"

    # --- 3) ragged M (111 rows) + multi-tile grid -----------------------------
    x2 = jax.random.normal(k_x2, (3, 37, input_size), dtype=jnp.float32)
    y2_ref = jax.nn.log_softmax(x2 @ weight.T + bias, axis=-1)
    y2 = decoder_forward(x2, w_t32, b_row32, t, tile_m=64)
    jax.block_until_ready(y2)
    assert y2.shape == (3, 37, tag_nums)
    assert jnp.allclose(y2, y2_ref, atol=1e-5, rtol=1e-5), "mismatch vs reference (ragged M)"

    # --- 4) bf16 output option (halves the dominant HBM write stream) --------
    y2_bf16 = decoder_forward(x2, w_t32, b_row32, t, tile_m=64, out_dtype=jnp.bfloat16)
    jax.block_until_ready(y2_bf16)
    assert y2_bf16.dtype == jnp.bfloat16
    assert jnp.allclose(y2_bf16.astype(jnp.float32), y2_ref, atol=5e-2, rtol=5e-2), \
        "mismatch vs reference (bf16 output)"

    print("KERNEL_OK")
</pallas_src>

<mosaic_0001>
module attributes {stable_mosaic.version = 11 : i64} {
  func.func @_decoder_kernel(%arg0: i32, %arg1: memref<8x32xf32, #tpu.memory_space<vmem>>, %arg2: memref<32x128xf32, #tpu.memory_space<vmem>>, %arg3: memref<1x128xf32, #tpu.memory_space<vmem>>, %arg4: memref<8x128xf32, #tpu.memory_space<vmem>>) attributes {dimension_semantics = [#tpu.dimension_semantics<parallel>], iteration_bounds = array<i64: 2>, scalar_prefetch = 0 : i64, scratch_operands = 0 : i64, tpu.core_type = #tpu.core_type<tc>, window_params = [{transform_indices = @transform_0, window_bounds = array<i64: 8, 32>}, {pipeline_mode = #tpu.pipeline_mode<synchronous>, transform_indices = @transform_1, window_bounds = array<i64: 32, 128>}, {pipeline_mode = #tpu.pipeline_mode<synchronous>, transform_indices = @transform_2, window_bounds = array<i64: 1, 128>}, {transform_indices = @transform_3, window_bounds = array<i64: 8, 128>}]} {
    %c0 = arith.constant 0 : index
    %c0_0 = arith.constant 0 : index
    %0 = vector.load %arg1[%c0, %c0_0] : memref<8x32xf32, #tpu.memory_space<vmem>>, vector<8x32xf32>
    %c0_1 = arith.constant 0 : index
    %c0_2 = arith.constant 0 : index
    %1 = vector.load %arg2[%c0_1, %c0_2] : memref<32x128xf32, #tpu.memory_space<vmem>>, vector<32x128xf32>
    %c0_3 = arith.constant 0 : index
    %c0_4 = arith.constant 0 : index
    %2 = vector.load %arg3[%c0_3, %c0_4] : memref<1x128xf32, #tpu.memory_space<vmem>>, vector<1x128xf32>
    %cst = arith.constant dense<0.000000e+00> : vector<8x128xf32>
    %3 = tpu.matmul %0, %1, %cst {dimension_numbers = #tpu.dot_dimension_numbers<[1], [0], [0], [1], [0, 0, 1, 1], [], []>} : vector<8x32xf32>, vector<32x128xf32>, vector<8x128xf32> -> vector<8x128xf32>
    %4 = vector.broadcast %2 : vector<1x128xf32> to vector<8x128xf32>
    %5 = arith.addf %3, %4 : vector<8x128xf32>
    %cst_5 = arith.constant dense<0xFF800000> : vector<8xf32>
    %6 = vector.multi_reduction <maximumf>, %5, %cst_5 [1] : vector<8x128xf32> to vector<8xf32>
    %7 = vector.shape_cast %6 : vector<8xf32> to vector<8x1xf32>
    %8 = vector.broadcast %7 : vector<8x1xf32> to vector<8x128xf32>
    %9 = arith.subf %5, %8 : vector<8x128xf32>
    %10 = math.exp %9 : vector<8x128xf32>
    %cst_6 = arith.constant dense<0.000000e+00> : vector<8xf32>
    %11 = vector.multi_reduction <add>, %10, %cst_6 [1] : vector<8x128xf32> to vector<8xf32>
    %12 = vector.shape_cast %11 : vector<8xf32> to vector<8x1xf32>
    %13 = math.log %12 : vector<8x1xf32>
    %14 = vector.broadcast %13 : vector<8x1xf32> to vector<8x128xf32>
    %15 = arith.subf %9, %14 : vector<8x128xf32>
    %c0_7 = arith.constant 0 : index
    %c0_8 = arith.constant 0 : index
    %16 = vector.load %arg4[%c0_7, %c0_8] : memref<8x128xf32, #tpu.memory_space<vmem>>, vector<8x128xf32>
    tpu.vector_store %arg4[%c0_7, %c0_8], %15 {strides = array<i32>} : memref<8x128xf32, #tpu.memory_space<vmem>>, vector<8x128xf32>,
    return
  }
  func.func @transform_0(%arg0: i32) -> (i32, i32) {
    %c0_i32 = arith.constant 0 : i32
    %c0_i32_0 = arith.constant 0 : i32
    return %arg0, %c0_i32 : i32, i32
  }
  func.func @transform_1(%arg0: i32) -> (i32, i32) {
    %c0_i32 = arith.constant 0 : i32
    %c0_i32_0 = arith.constant 0 : i32
    %c0_i32_1 = arith.constant 0 : i32
    return %c0_i32, %c0_i32_0 : i32, i32
  }
  func.func @transform_2(%arg0: i32) -> (i32, i32) {
    %c0_i32 = arith.constant 0 : i32
    %c0_i32_0 = arith.constant 0 : i32
    %c0_i32_1 = arith.constant 0 : i32
    return %c0_i32, %c0_i32_0 : i32, i32
  }
  func.func @transform_3(%arg0: i32) -> (i32, i32) {
    %c0_i32 = arith.constant 0 : i32
    %c0_i32_0 = arith.constant 0 : i32
    return %arg0, %c0_i32 : i32, i32
  }
}

module attributes {stable_mosaic.version = 11 : i64} {
  func.func @_decoder_kernel(%arg0: i32, %arg1: memref<8x32xf32, #tpu.memory_space<vmem>>, %arg2: memref<32x128xf32, #tpu.memory_space<vmem>>, %arg3: memref<1x128xf32, #tpu.memory_space<vmem>>, %arg4: memref<8x128xf32, #tpu.memory_space<vmem>>) attributes {dimension_semantics = [#tpu.dimension_semantics<parallel>], iteration_bounds = array<i64: 2>, scalar_prefetch = 0 : i64, scratch_operands = 0 : i64, tpu.core_type = #tpu.core_type<tc>, window_params = [{transform_indices = @transform_0, window_bounds = array<i64: 8, 32>}, {pipeline_mode = #tpu.pipeline_mode<synchronous>, transform_indices = @transform_1, window_bounds = array<i64: 32, 128>}, {pipeline_mode = #tpu.pipeline_mode<synchronous>, transform_indices = @transform_2, window_bounds = array<i64: 1, 128>}, {transform_indices = @transform_3, window_bounds = array<i64: 8, 128>}]} {
    %c0 = arith.constant 0 : index
    %c0_0 = arith.constant 0 : index
    %0 = vector.load %arg1[%c0, %c0_0] : memref<8x32xf32, #tpu.memory_space<vmem>>, vector<8x32xf32>
    %c0_1 = arith.constant 0 : index
    %c0_2 = arith.constant 0 : index
    %1 = vector.load %arg2[%c0_1, %c0_2] : memref<32x128xf32, #tpu.memory_space<vmem>>, vector<32x128xf32>
    %c0_3 = arith.constant 0 : index
    %c0_4 = arith.constant 0 : index
    %2 = vector.load %arg3[%c0_3, %c0_4] : memref<1x128xf32, #tpu.memory_space<vmem>>, vector<1x128xf32>
    %cst = arith.constant dense<0.000000e+00> : vector<8x128xf32>
    %3 = tpu.matmul %0, %1, %cst {dimension_numbers = #tpu.dot_dimension_numbers<[1], [0], [0], [1], [0, 0, 1, 1], [], []>} : vector<8x32xf32>, vector<32x128xf32>, vector<8x128xf32> -> vector<8x128xf32>
    %4 = vector.broadcast %2 : vector<1x128xf32> to vector<8x128xf32>
    %5 = arith.addf %3, %4 : vector<8x128xf32>
    %cst_5 = arith.constant dense<0xFF800000> : vector<8xf32>
    %6 = vector.multi_reduction <maximumf>, %5, %cst_5 [1] : vector<8x128xf32> to vector<8xf32>
    %7 = vector.shape_cast %6 : vector<8xf32> to vector<8x1xf32>
    %8 = vector.broadcast %7 : vector<8x1xf32> to vector<8x128xf32>
    %9 = arith.subf %5, %8 : vector<8x128xf32>
    %10 = math.exp %9 : vector<8x128xf32>
    %cst_6 = arith.constant dense<0.000000e+00> : vector<8xf32>
    %11 = vector.multi_reduction <add>, %10, %cst_6 [1] : vector<8x128xf32> to vector<8xf32>
    %12 = vector.shape_cast %11 : vector<8xf32> to vector<8x1xf32>
    %13 = math.log %12 : vector<8x1xf32>
    %14 = vector.broadcast %13 : vector<8x1xf32> to vector<8x128xf32>
    %15 = arith.subf %9, %14 : vector<8x128xf32>
    %c0_7 = arith.constant 0 : index
    %c0_8 = arith.constant 0 : index
    %16 = vector.load %arg4[%c0_7, %c0_8] : memref<8x128xf32, #tpu.memory_space<vmem>>, vector<8x128xf32>
    tpu.vector_store %arg4[%c0_7, %c0_8], %15 {strides = array<i32>} : memref<8x128xf32, #tpu.memory_space<vmem>>, vector<8x128xf32>,
    return
  }
  func.func @transform_0(%arg0: i32) -> (i32, i32) {
    %c0_i32 = arith.constant 0 : i32
    %c0_i32_0 = arith.constant 0 : i32
    return %arg0, %c0_i32 : i32, i32
  }
  func.func @transform_1(%arg0: i32) -> (i32, i32) {
    %c0_i32 = arith.constant 0 : i32
    %c0_i32_0 = arith.constant 0 : i32
    %c0_i32_1 = arith.constant 0 : i32
    return %c0_i32, %c0_i32_0 : i32, i32
  }
  func.func @transform_2(%arg0: i32) -> (i32, i32) {
    %c0_i32 = arith.constant 0 : i32
    %c0_i32_0 = arith.constant 0 : i32
    %c0_i32_1 = arith.constant 0 : i32
    return %c0_i32, %c0_i32_0 : i32, i32
  }
  func.func @transform_3(%arg0: i32) -> (i32, i32) {
    %c0_i32 = arith.constant 0 : i32
    %c0_i32_0 = arith.constant 0 : i32
    return %arg0, %c0_i32 : i32, i32
  }
}

</mosaic_0001>

<llo_original>
// kernel: _decoder_forward_impl.1
$region0: #{_decoder_forward_impl.1}
  #allocation0 [shape = 'u32[]', space=smem, size = 0x4, offset = 0x4, fixed_abs, tag = 'smem constant byte address 0x4 - core index']
  #allocation1 [shape = 'u32[144,128]{1,0:T(1,128)}', space=vmem, size = 0x12000, scoped, tag = 'internal scratch']
  %s0 = inlined_call_operand.hbm [shape: f32[16,32], index: 0, kind: input, shape index: {}]
  %s1 = inlined_call_operand.hbm [shape: f32[32,128], index: 1, kind: input, shape index: {}]
  %s2 = inlined_call_operand.vmem [shape: f32[1,128], index: 2, kind: input, shape index: {}]
  %s3 = inlined_call_operand.vmem [shape: f32[16,128], index: 3, kind: output, shape index: {}]
  %s4 = sld [smem:[#allocation0]]
  $region53: #{_decoder_forward_impl.1} parent=0
    _
  %s6 = ssub.s32 1, %s4
  %s7 = scalar_select 0, %s6, %s4
  $region1: #{_decoder_forward_impl.1} parent=0
    #allocation2 [shape = 'u8[8192]{0}', space=vmem, size = 0x2000, scoped, tag = 'input window, operand 0']
    #allocation3 [shape = 's32[2]{0}', space=sflag, size = 0x8, scoped, tag = 'scoped memory for _decoder_forward_impl.1']
    #allocation4 [shape = 'u8[16384]{0}', space=vmem, size = 0x4000, scoped, tag = 'input window, operand 1, single buffered']
    #allocation5 [shape = 's32[1]{0}', space=sflag, size = 0x4, scoped, tag = 'scoped memory for _decoder_forward_impl.1']
    %8 = vsyncpa [#allocation3], 0
    %s9 = scalar_lea.sflag [#allocation3], 1
    %10 = vsyncpa %s9, 0
    %11 = vsyncpa [#allocation5], 0
    loop: start=0, step=1, limit=4
    $region2: #{_decoder_forward_impl.1} parent=1 // loop_pre_header
      _
    $region3: #{_decoder_forward_impl.1} parent=1 // loop_header
      %s13 = sphi 0, %s17
      %p14 = scmp.ge.s32.totalorder %s13, 4
      %s23 = sphi 0, %s25
      %s26 = sphi 0, %s23
      %s27 = sphi 0, %s26
      %s43 = sphi 0, %s27
      %s47 = sphi 0, %s47
      %s49 = sphi 0, %s47
      %s50 = sphi 0, %s49
      %s64 = sphi 0, %s50
      %s68 = sphi 0, %s68
      %s70 = sphi 0, %s68
      %s71 = sphi 0, %s70
      %s85 = sphi 0, %s71
      %s91 = sphi 0, %s93
      %s94 = sphi 0, %s91
      %s95 = sphi 0, %s94
      %s111 = sphi 0, %s95
    $region4: #{_decoder_forward_impl.1} parent=1 // loop_header_branch
      %16 = sbr.rel (%p14) target = $region8
    $region5: #{_decoder_forward_impl.1} parent=1 // loop_body
      %s18 = ssub.s32 %s13, 1
      %s19 = ssub.s32 %s13, 2
      %s20 = sadd.s32 %s13, 1
      %s21 = ssub.s32 %s13, %s20
      %p22 = scmp.eq.s32.totalorder %s21, 0
      %s24 = sadd.s32 %s23, 1
      %s25 = scalar_select %p22, %s23, %s24
      %p28 = pneg %p22
      %p29 = scmp.eq.s32.totalorder %s13, 1
      %p30 = por %p28, %p29
      %p31 = scmp.ne.s32.totalorder %s23, %s26
      %p32 = scmp.eq.s32.totalorder %s13, 0
      %p33 = por %p31, %p32
      %p34 = scmp.ne.s32.totalorder %s23, %s26
      %p35 = scmp.eq.s32.totalorder %s18, 1
      %p36 = por %p34, %p35
      %p37 = scmp.ne.s32.totalorder %s26, %s27
      %p38 = scmp.eq.s32.totalorder %s18, 0
      %p39 = por %p37, %p38
      %p40 = scmp.ne.s32.totalorder %s26, %s27
      %p41 = scmp.eq.s32.totalorder %s19, 1
      %p42 = por %p40, %p41
      %p44 = scmp.ne.s32.totalorder %s27, %s43
      %p45 = scmp.eq.s32.totalorder %s19, 0
      %p46 = por %p44, %p45
      %s48 = sadd.s32 %s47, 1
      %p51 = scmp.eq.s32.totalorder %s13, 1
      %p52 = scmp.ne.s32.totalorder %s47, %s49
      %p53 = scmp.eq.s32.totalorder %s13, 0
      %p54 = por %p52, %p53
      %p55 = scmp.ne.s32.totalorder %s47, %s49
      %p56 = scmp.eq.s32.totalorder %s18, 1
      %p57 = por %p55, %p56
      %p58 = scmp.ne.s32.totalorder %s49, %s50
      %p59 = scmp.eq.s32.totalorder %s18, 0
      %p60 = por %p58, %p59
      %p61 = scmp.ne.s32.totalorder %s49, %s50
      %p62 = scmp.eq.s32.totalorder %s19, 1
      %p63 = por %p61, %p62
      %p65 = scmp.ne.s32.totalorder %s50, %s64
      %p66 = scmp.eq.s32.totalorder %s19, 0
      %p67 = por %p65, %p66
      %s69 = sadd.s32 %s68, 1
      %p72 = scmp.eq.s32.totalorder %s13, 1
      %p73 = scmp.ne.s32.totalorder %s68, %s70
      %p74 = scmp.eq.s32.totalorder %s13, 0
      %p75 = por %p73, %p74
      %p76 = scmp.ne.s32.totalorder %s68, %s70
      %p77 = scmp.eq.s32.totalorder %s18, 1
      %p78 = por %p76, %p77
      %p79 = scmp.ne.s32.totalorder %s70, %s71
      %p80 = scmp.eq.s32.totalorder %s18, 0
      %p81 = por %p79, %p80
      %p82 = scmp.ne.s32.totalorder %s70, %s71
      %p83 = scmp.eq.s32.totalorder %s19, 1
      %p84 = por %p82, %p83
      %p86 = scmp.ne.s32.totalorder %s71, %s85
      %p87 = scmp.eq.s32.totalorder %s19, 0
      %p88 = por %p86, %p87
      %s89 = ssub.s32 %s13, %s20
      %p90 = scmp.eq.s32.totalorder %s89, 0
      %s92 = sadd.s32 %s91, 1
      %s93 = scalar_select %p90, %s91, %s92
      %p96 = pneg %p90
      %p97 = scmp.eq.s32.totalorder %s13, 1
      %p98 = por %p96, %p97
      %p99 = scmp.ne.s32.totalorder %s91, %s94
      %p100 = scmp.eq.s32.totalorder %s13, 0
      %p101 = por %p99, %p100
      %p102 = scmp.ne.s32.totalorder %s91, %s94
      %p103 = scmp.eq.s32.totalorder %s18, 1
      %p104 = por %p102, %p103
      %p105 = scmp.ne.s32.totalorder %s94, %s95
      %p106 = scmp.eq.s32.totalorder %s18, 0
      %p107 = por %p105, %p106
      %p108 = scmp.ne.s32.totalorder %s94, %s95
      %p109 = scmp.eq.s32.totalorder %s19, 1
      %p110 = por %p108, %p109
      %p112 = scmp.ne.s32.totalorder %s95, %s111
      %p113 = scmp.eq.s32.totalorder %s19, 0
      %p114 = por %p112, %p113
      %p115 = scmp.le.s32.totalorder 1, %s13
      %p116 = scmp.lt.s32.totalorder %s13, 3
      %p117 = pnand %p115, %p116
      %p118 = pneg %p117
      // Predicated region
      $region9: #{_decoder_forward_impl.1} parent=5 // pred_check
        _
      $region10: #{_decoder_forward_impl.1} parent=5 // pred_check_branch
        %120 = sbr.rel (%p117) target = $region12
      $region11: #{_decoder_forward_impl.1} parent=5 // pred_region
        %s121 = ssub.s32 %s13, 1
        // Predicated region
        $region13: #{_decoder_forward_impl.1} parent=11 // pred_check
          %p122 = pneg %p60
        $region14: #{_decoder_forward_impl.1} parent=11 // pred_check_branch
          %124 = sbr.rel (%p122) target = $region16
        $region15: #{_decoder_forward_impl.1} parent=11 // pred_region
          %s126 = ssub.s32 512, 512
          %127 = vsyncadd [#allocation5], %s126
          %s128 = sshll.u32 [#allocation4], 4
          %s129 = int_to_ptr.vmem [resolvable:$true] %s128
          %134 = dma.hbm_to_vmem [thread:$0]  %s1, 512, %s129, [#allocation5], 128, 128, 8
        $region16: #{_decoder_forward_impl.1} parent=11 // pred_fallthru
          _
        // Predicated region
        $region17: #{_decoder_forward_impl.1} parent=11 // pred_check
          %p135 = pneg %p81
        $region18: #{_decoder_forward_impl.1} parent=11 // pred_check_branch
          %137 = sbr.rel (%p135) target = $region20
        $region19: #{_decoder_forward_impl.1} parent=11 // pred_region
          _
        $region20: #{_decoder_forward_impl.1} parent=11 // pred_fallthru
          _
      $region12: #{_decoder_forward_impl.1} parent=5 // pred_fallthru
        _
      %p138 = scmp.lt.s32.totalorder %s13, 2
      // Predicated region
      $region21: #{_decoder_forward_impl.1} parent=5 // pred_check
        %p139 = pneg %p138
      $region22: #{_decoder_forward_impl.1} parent=5 // pred_check_branch
        %141 = sbr.rel (%p139) target = $region24
      $region23: #{_decoder_forward_impl.1} parent=5 // pred_region
        // Predicated region
        $region25: #{_decoder_forward_impl.1} parent=23 // pred_check
          %p142 = pneg %p33
        $region26: #{_decoder_forward_impl.1} parent=23 // pred_check_branch
          %144 = sbr.rel (%p142) target = $region28
        $region27: #{_decoder_forward_impl.1} parent=23 // pred_region
          %s145 = sand.u32 %s23, 1
          %s146 = scalar_lea.sflag [#allocation3], %s145
          %s147 = sand.u32 %s23, 1
          %s148 = smul.addr %s147, 8
          %s149 = scalar_lea.vmem [#allocation2], %s148
          %s151 = ssub.s32 128, 128
          %152 = vsyncadd %s146, %s151
          %s153 = smul.addr %s13, 128
          %s154 = scalar_lea.hbm %s0, %s153
          %s156 = sshll.u32 %s149, 4
          %s157 = int_to_ptr.vmem [resolvable:$true] %s156
          %159 = dma.hbm_to_vmem [thread:$0]  %s154, 128, %s157, %s146
        $region28: #{_decoder_forward_impl.1} parent=23 // pred_fallthru
          _
      $region24: #{_decoder_forward_impl.1} parent=5 // pred_fallthru
        _
      %p160 = scmp.le.s32.totalorder 1, %s13
      %p161 = scmp.lt.s32.totalorder %s13, 3
      %p162 = pnand %p160, %p161
      %p163 = pneg %p162
      // Predicated region
      $region29: #{_decoder_forward_impl.1} parent=5 // pred_check
        _
      $region30: #{_decoder_forward_impl.1} parent=5 // pred_check_branch
        %165 = sbr.rel (%p162) target = $region32
      $region31: #{_decoder_forward_impl.1} parent=5 // pred_region
        %s166 = ssub.s32 %s13, 1
        %s167 = sand.u32 %s26, 1
        %s168 = scalar_lea.sflag [#allocation3], %s167
        %s169 = sand.u32 %s26, 1
        %s170 = smul.addr %s169, 8
        %s171 = scalar_lea.vmem [#allocation2], %s170
        // Predicated region
        $region33: #{_decoder_forward_impl.1} parent=31 // pred_check
          %p172 = pneg %p39
        $region34: #{_decoder_forward_impl.1} parent=31 // pred_check_branch
          %174 = sbr.rel (%p172) target = $region36
        $region35: #{_decoder_forward_impl.1} parent=31 // pred_region
          %175 = dma.done %s168, 128
        $region36: #{_decoder_forward_impl.1} parent=31 // pred_fallthru
          _
        // Predicated region
        $region37: #{_decoder_forward_impl.1} parent=31 // pred_check
          %p176 = pneg %p60
        $region38: #{_decoder_forward_impl.1} parent=31 // pred_check_branch
          %178 = sbr.rel (%p176) target = $region40
        $region39: #{_decoder_forward_impl.1} parent=31 // pred_region
          %179 = dma.done [#allocation5], 512
        $region40: #{_decoder_forward_impl.1} parent=31 // pred_fallthru
          _
        %s180 = sand.u32 %s26, 1
        %s181 = scalar_lea.sflag [#allocation3], %s180
        %s182 = sand.u32 %s26, 1
        %s183 = smul.addr %s182, 8
        %s184 = scalar_lea.vmem [#allocation2], %s183
        %p185 = pneg %p39
        %p186 = pneg %p36
        %p187 = pneg %p60
        %p188 = pneg %p57
        %p189 = pneg %p81
        %p190 = pneg %p78
        %p191 = pneg %p107
        %p192 = pneg %p104
        %p193 = scmp.lt.s32.totalorder %s18, 1
        %s194 = scalar_select %p193, %s18, 1
        %s195 = smul.addr %s194, 8
        %s196 = scalar_lea.vmem %s3, %s195
        %p197 = scmp.lt.s32.totalorder %s18, 1
        %s198 = scalar_select %p197, %s18, 1
        %s199 = smul.addr %s198, 8
        %s200 = scalar_lea.vmem %s3, %s199
        %v201 = vld [vmem:[%s171] sm:$0xff]
        %v202 = vld [vmem:[#allocation4] sm:$0xff]
        %v203 = vld [vmem:[#allocation4 + $0x8] sm:$0xff]
        %v204 = vld [vmem:[#allocation4 + $0x10] sm:$0xff]
        %v205 = vld [vmem:[#allocation4 + $0x18] sm:$0xff]
        %v206 = vld [vmem:[%s2] sm:$0x1]
        %v208 = vlaneseq
        %v209 = vshrl.u32 %v208, 7
        %v210 = vsub.s32 0, %v209
        %v211 = vrot.slane %v206, %v210
        %vm213 = vcmask 261120
        %v215 = vsel %vm213, %v201, 0
        %217 = vmatprep.subr.mxu0 0.0
        %218 = vmatpush1.msra.mxu0 0.0
        %219 = vmatprep.subr.mxu0 0.0
        %220 = vmatpush1.msra.mxu0 0.0
        %221 = vmatprep.subr.mxu0 0.0
        %222 = vmatpush1.msra.mxu0 0.0
        %223 = vmatprep.subr.mxu0 0.0
        %224 = vmatpush1.msra.mxu0 0.0
        %225 = vmatprep.subr.mxu0 0.0
        %226 = vmatpush1.msra.mxu0 0.0
        %227 = vmatprep.subr.mxu0 0.0
        %228 = vmatpush1.msra.mxu0 0.0
        %229 = vmatprep.subr.mxu0 0.0
        %230 = vmatpush1.msra.mxu0 0.0
        %231 = vmatprep.subr.mxu0 0.0
        %232 = vmatpush1.msra.mxu0 0.0
        %233 = vmatprep.subr.mxu0 0.0
        %234 = vmatpush1.msra.mxu0 0.0
        %235 = vmatprep.subr.mxu0 0.0
        %236 = vmatpush1.msra.mxu0 0.0
        %237 = vmatprep.subr.mxu0 0.0
        %238 = vmatpush1.msra.mxu0 0.0
        %239 = vmatprep.subr.mxu0 0.0
        %240 = vmatpush1.msra.mxu0 0.0
        %241 = vmatprep.subr.mxu0 0.0
        %242 = vmatpush1.msra.mxu0 %v205
        %243 = vmatprep.subr.mxu0 0.0
        %244 = vmatpush1.msra.mxu0 %v204
        %245 = vmatprep.subr.mxu0 0.0
        %246 = vmatpush1.msra.mxu0 %v203
        %247 = vmatprep.subr.mxu0 0.0
        %248 = vmatpush1.msra.mxu0 %v202
        %249 = vmatprep.subr.mxu0 0.0
        %250 = vmatpush2.msra.mxu0 0.0
        %251 = vmatprep.subr.mxu0 0.0
        %252 = vmatpush2.msra.mxu0 0.0
        %253 = vmatprep.subr.mxu0 0.0
        %254 = vmatpush2.msra.mxu0 0.0
        %255 = vmatprep.subr.mxu0 0.0
        %256 = vmatpush2.msra.mxu0 0.0
        %257 = vmatprep.subr.mxu0 0.0
        %258 = vmatpush2.msra.mxu0 0.0
        %259 = vmatprep.subr.mxu0 0.0
        %260 = vmatpush2.msra.mxu0 0.0
        %261 = vmatprep.subr.mxu0 0.0
        %262 = vmatpush2.msra.mxu0 0.0
        %263 = vmatprep.subr.mxu0 0.0
        %264 = vmatpush2.msra.mxu0 0.0
        %265 = vmatprep.subr.mxu0 0.0
        %266 = vmatpush2.msra.mxu0 0.0
        %267 = vmatprep.subr.mxu0 0.0
        %268 = vmatpush2.msra.mxu0 0.0
        %269 = vmatprep.subr.mxu0 0.0
        %270 = vmatpush2.msra.mxu0 0.0
        %271 = vmatprep.subr.mxu0 0.0
        %272 = vmatpush2.msra.mxu0 0.0
        %273 = vmatprep.subr.mxu0 0.0
        %274 = vmatpush2.msra.mxu0 0.0
        %275 = vmatprep.subr.mxu0 0.0
        %276 = vmatpush2.msra.mxu0 0.0
        %277 = vmatprep.subr.mxu0 0.0
        %278 = vmatpush2.msra.mxu0 0.0
        %279 = vmatprep.subr.mxu0 0.0
        %280 = vmatpush2.msra.mxu0 0.0
        %281 = vmatprep.mubr.f32.mxu0 0.0
        %282 = vmatmul.mubr.f32.gmra.mxu0 %v215
        %v283 = vpop.f32.mrf.mxu0
        %v284 = vadd.f32 %v211, %v283
        %v285 = vpop.f32.mrf.mxu0
        %286 = vdwg.mxu0
        %287 = vmax.xlane.f32.xlu0 %v284
        %v288 = vpop.xlane.xlu0 %287
        %v289 = vsub.f32 %v284, %v288
        %v290 = vmul.f32 %v289, 1.442695
        %v291 = vpow.pop %v290
        %292 = vadd.xlane.f32.xlu0 %v291
        %v293 = vpop.xlane.xlu0 %292
        %v294 = vlog2.pop %v293
        %v295 = vmul.f32 %v294, 0.6931472
        %v296 = vsub.f32 %v289, %v295
        %297 = vst [vmem:[%s200] sm:$0xff] %v296
        %p298 = scmp.lt.s32.totalorder %s18, 1
        %s299 = scalar_select %p298, %s18, 1
        %s300 = smul.addr %s299, 8
        %s301 = scalar_lea.vmem %s3, %s300
        // Predicated region
        $region41: #{_decoder_forward_impl.1} parent=31 // pred_check
          %p302 = pneg %p104
        $region42: #{_decoder_forward_impl.1} parent=31 // pred_check_branch
          %304 = sbr.rel (%p302) target = $region44
        $region43: #{_decoder_forward_impl.1} parent=31 // pred_region
          _
        $region44: #{_decoder_forward_impl.1} parent=31 // pred_fallthru
          _
      $region32: #{_decoder_forward_impl.1} parent=5 // pred_fallthru
        _
      %p305 = scmp.le.s32.totalorder 2, %s13
      // Predicated region
      $region45: #{_decoder_forward_impl.1} parent=5 // pred_check
        %p306 = pneg %p305
      $region46: #{_decoder_forward_impl.1} parent=5 // pred_check_branch
        %308 = sbr.rel (%p306) target = $region48
      $region47: #{_decoder_forward_impl.1} parent=5 // pred_region
        %s309 = ssub.s32 %s13, 2
        // Predicated region
        $region49: #{_decoder_forward_impl.1} parent=47 // pred_check
          %p310 = pneg %p110
        $region50: #{_decoder_forward_impl.1} parent=47 // pred_check_branch
          %312 = sbr.rel (%p310) target = $region52
        $region51: #{_decoder_forward_impl.1} parent=47 // pred_region
          %p313 = scmp.lt.s32.totalorder %s19, 1
          %s314 = scalar_select %p313, %s19, 1
          %s315 = smul.addr %s314, 8
          %s316 = scalar_lea.vmem %s3, %s315
        $region52: #{_decoder_forward_impl.1} parent=47 // pred_fallthru
          _
      $region48: #{_decoder_forward_impl.1} parent=5 // pred_fallthru
        _
    $region6: #{_decoder_forward_impl.1} parent=1 // loop_footer
      %s17 = sadd.s32 1, %s13
    $region7: #{_decoder_forward_impl.1} parent=1 // loop_footer_branch
      %12 = sbr.rel target = $region3
    $region8: #{_decoder_forward_impl.1} parent=1 // loop_exit
      _
    %317 = vsyncpa [#allocation3], 1
    %s318 = scalar_lea.sflag [#allocation3], 1
    %319 = vsyncpa %s318, 1
    %320 = vsyncpa [#allocation5], 1

// kernel: _decoder_forward_impl.1
$region0: #{_decoder_forward_impl.1}
  #allocation0 [shape = 'u32[]', space=smem, size = 0x4, offset = 0x4, fixed_abs, tag = 'smem constant byte address 0x4 - core index']
  #allocation1 [shape = 'u32[144,128]{1,0:T(1,128)}', space=vmem, size = 0x12000, scoped, tag = 'internal scratch']
  %s0 = inlined_call_operand.hbm [shape: f32[16,32], index: 0, kind: input, shape index: {}]
  %s1 = inlined_call_operand.hbm [shape: f32[32,128], index: 1, kind: input, shape index: {}]
  %s2 = inlined_call_operand.vmem [shape: f32[1,128], index: 2, kind: input, shape index: {}]
  %s3 = inlined_call_operand.vmem [shape: f32[16,128], index: 3, kind: output, shape index: {}]
  %s4 = sld [smem:[#allocation0]]
  $region53: #{_decoder_forward_impl.1} parent=0
    _
  %s6 = ssub.s32 1, %s4
  %s7 = scalar_select 0, %s6, %s4
  $region1: #{_decoder_forward_impl.1} parent=0
    #allocation2 [shape = 'u8[8192]{0}', space=vmem, size = 0x2000, scoped, tag = 'input window, operand 0']
    #allocation3 [shape = 's32[2]{0}', space=sflag, size = 0x8, scoped, tag = 'scoped memory for _decoder_forward_impl.1']
    #allocation4 [shape = 'u8[16384]{0}', space=vmem, size = 0x4000, scoped, tag = 'input window, operand 1, single buffered']
    #allocation5 [shape = 's32[1]{0}', space=sflag, size = 0x4, scoped, tag = 'scoped memory for _decoder_forward_impl.1']
    %8 = vsyncpa [#allocation3], 0
    %s9 = scalar_lea.sflag [#allocation3], 1
    %10 = vsyncpa %s9, 0
    %11 = vsyncpa [#allocation5], 0
    loop: start=0, step=1, limit=4
    $region2: #{_decoder_forward_impl.1} parent=1 // loop_pre_header
      _
    $region3: #{_decoder_forward_impl.1} parent=1 // loop_header
      %s13 = sphi 0, %s17
      %p14 = scmp.ge.s32.totalorder %s13, 4
      %s23 = sphi 0, %s25
      %s26 = sphi 0, %s23
      %s27 = sphi 0, %s26
      %s43 = sphi 0, %s27
      %s47 = sphi 0, %s47
      %s49 = sphi 0, %s47
      %s50 = sphi 0, %s49
      %s64 = sphi 0, %s50
      %s68 = sphi 0, %s68
      %s70 = sphi 0, %s68
      %s71 = sphi 0, %s70
      %s85 = sphi 0, %s71
      %s91 = sphi 0, %s93
      %s94 = sphi 0, %s91
      %s95 = sphi 0, %s94
      %s111 = sphi 0, %s95
    $region4: #{_decoder_forward_impl.1} parent=1 // loop_header_branch
      %16 = sbr.rel (%p14) target = $region8
    $region5: #{_decoder_forward_impl.1} parent=1 // loop_body
      %s18 = ssub.s32 %s13, 1
      %s19 = ssub.s32 %s13, 2
      %s20 = sadd.s32 %s13, 1
      %s21 = ssub.s32 %s13, %s20
      %p22 = scmp.eq.s32.totalorder %s21, 0
      %s24 = sadd.s32 %s23, 1
      %s25 = scalar_select %p22, %s23, %s24
      %p28 = pneg %p22
      %p29 = scmp.eq.s32.totalorder %s13, 1
      %p30 = por %p28, %p29
      %p31 = scmp.ne.s32.totalorder %s23, %s26
      %p32 = scmp.eq.s32.totalorder %s13, 0
      %p33 = por %p31, %p32
      %p34 = scmp.ne.s32.totalorder %s23, %s26
      %p35 = scmp.eq.s32.totalorder %s18, 1
      %p36 = por %p34, %p35
      %p37 = scmp.ne.s32.totalorder %s26, %s27
      %p38 = scmp.eq.s32.totalorder %s18, 0
      %p39 = por %p37, %p38
      %p40 = scmp.ne.s32.totalorder %s26, %s27
      %p41 = scmp.eq.s32.totalorder %s19, 1
      %p42 = por %p40, %p41
      %p44 = scmp.ne.s32.totalorder %s27, %s43
      %p45 = scmp.eq.s32.totalorder %s19, 0
      %p46 = por %p44, %p45
      %s48 = sadd.s32 %s47, 1
      %p51 = scmp.eq.s32.totalorder %s13, 1
      %p52 = scmp.ne.s32.totalorder %s47, %s49
      %p53 = scmp.eq.s32.totalorder %s13, 0
      %p54 = por %p52, %p53
      %p55 = scmp.ne.s32.totalorder %s47, %s49
      %p56 = scmp.eq.s32.totalorder %s18, 1
      %p57 = por %p55, %p56
      %p58 = scmp.ne.s32.totalorder %s49, %s50
      %p59 = scmp.eq.s32.totalorder %s18, 0
      %p60 = por %p58, %p59
      %p61 = scmp.ne.s32.totalorder %s49, %s50
      %p62 = scmp.eq.s32.totalorder %s19, 1
      %p63 = por %p61, %p62
      %p65 = scmp.ne.s32.totalorder %s50, %s64
      %p66 = scmp.eq.s32.totalorder %s19, 0
      %p67 = por %p65, %p66
      %s69 = sadd.s32 %s68, 1
      %p72 = scmp.eq.s32.totalorder %s13, 1
      %p73 = scmp.ne.s32.totalorder %s68, %s70
      %p74 = scmp.eq.s32.totalorder %s13, 0
      %p75 = por %p73, %p74
      %p76 = scmp.ne.s32.totalorder %s68, %s70
      %p77 = scmp.eq.s32.totalorder %s18, 1
      %p78 = por %p76, %p77
      %p79 = scmp.ne.s32.totalorder %s70, %s71
      %p80 = scmp.eq.s32.totalorder %s18, 0
      %p81 = por %p79, %p80
      %p82 = scmp.ne.s32.totalorder %s70, %s71
      %p83 = scmp.eq.s32.totalorder %s19, 1
      %p84 = por %p82, %p83
      %p86 = scmp.ne.s32.totalorder %s71, %s85
      %p87 = scmp.eq.s32.totalorder %s19, 0
      %p88 = por %p86, %p87
      %s89 = ssub.s32 %s13, %s20
      %p90 = scmp.eq.s32.totalorder %s89, 0
      %s92 = sadd.s32 %s91, 1
      %s93 = scalar_select %p90, %s91, %s92
      %p96 = pneg %p90
      %p97 = scmp.eq.s32.totalorder %s13, 1
      %p98 = por %p96, %p97
      %p99 = scmp.ne.s32.totalorder %s91, %s94
      %p100 = scmp.eq.s32.totalorder %s13, 0
      %p101 = por %p99, %p100
      %p102 = scmp.ne.s32.totalorder %s91, %s94
      %p103 = scmp.eq.s32.totalorder %s18, 1
      %p104 = por %p102, %p103
      %p105 = scmp.ne.s32.totalorder %s94, %s95
      %p106 = scmp.eq.s32.totalorder %s18, 0
      %p107 = por %p105, %p106
      %p108 = scmp.ne.s32.totalorder %s94, %s95
      %p109 = scmp.eq.s32.totalorder %s19, 1
      %p110 = por %p108, %p109
      %p112 = scmp.ne.s32.totalorder %s95, %s111
      %p113 = scmp.eq.s32.totalorder %s19, 0
      %p114 = por %p112, %p113
      %p115 = scmp.le.s32.totalorder 1, %s13
      %p116 = scmp.lt.s32.totalorder %s13, 3
      %p117 = pnand %p115, %p116
      %p118 = pneg %p117
      // Predicated region
      $region9: #{_decoder_forward_impl.1} parent=5 // pred_check
        _
      $region10: #{_decoder_forward_impl.1} parent=5 // pred_check_branch
        %120 = sbr.rel (%p117) target = $region12
      $region11: #{_decoder_forward_impl.1} parent=5 // pred_region
        %s121 = ssub.s32 %s13, 1
        // Predicated region
        $region13: #{_decoder_forward_impl.1} parent=11 // pred_check
          %p122 = pneg %p60
        $region14: #{_decoder_forward_impl.1} parent=11 // pred_check_branch
          %124 = sbr.rel (%p122) target = $region16
        $region15: #{_decoder_forward_impl.1} parent=11 // pred_region
          %s126 = ssub.s32 512, 512
          %127 = vsyncadd [#allocation5], %s126
          %s128 = sshll.u32 [#allocation4], 4
          %s129 = int_to_ptr.vmem [resolvable:$true] %s128
          %134 = dma.hbm_to_vmem [thread:$0]  %s1, 512, %s129, [#allocation5], 128, 128, 8
        $region16: #{_decoder_forward_impl.1} parent=11 // pred_fallthru
          _
        // Predicated region
        $region17: #{_decoder_forward_impl.1} parent=11 // pred_check
          %p135 = pneg %p81
        $region18: #{_decoder_forward_impl.1} parent=11 // pred_check_branch
          %137 = sbr.rel (%p135) target = $region20
        $region19: #{_decoder_forward_impl.1} parent=11 // pred_region
          _
        $region20: #{_decoder_forward_impl.1} parent=11 // pred_fallthru
          _
      $region12: #{_decoder_forward_impl.1} parent=5 // pred_fallthru
        _
      %p138 = scmp.lt.s32.totalorder %s13, 2
      // Predicated region
      $region21: #{_decoder_forward_impl.1} parent=5 // pred_check
        %p139 = pneg %p138
      $region22: #{_decoder_forward_impl.1} parent=5 // pred_check_branch
        %141 = sbr.rel (%p139) target = $region24
      $region23: #{_decoder_forward_impl.1} parent=5 // pred_region
        // Predicated region
        $region25: #{_decoder_forward_impl.1} parent=23 // pred_check
          %p142 = pneg %p33
        $region26: #{_decoder_forward_impl.1} parent=23 // pred_check_branch
          %144 = sbr.rel (%p142) target = $region28
        $region27: #{_decoder_forward_impl.1} parent=23 // pred_region
          %s145 = sand.u32 %s23, 1
          %s146 = scalar_lea.sflag [#allocation3], %s145
          %s147 = sand.u32 %s23, 1
          %s148 = smul.addr %s147, 8
          %s149 = scalar_lea.vmem [#allocation2], %s148
          %s151 = ssub.s32 128, 128
          %152 = vsyncadd %s146, %s151
          %s153 = smul.addr %s13, 128
          %s154 = scalar_lea.hbm %s0, %s153
          %s156 = sshll.u32 %s149, 4
          %s157 = int_to_ptr.vmem [resolvable:$true] %s156
          %159 = dma.hbm_to_vmem [thread:$0]  %s154, 128, %s157, %s146
        $region28: #{_decoder_forward_impl.1} parent=23 // pred_fallthru
          _
      $region24: #{_decoder_forward_impl.1} parent=5 // pred_fallthru
        _
      %p160 = scmp.le.s32.totalorder 1, %s13
      %p161 = scmp.lt.s32.totalorder %s13, 3
      %p162 = pnand %p160, %p161
      %p163 = pneg %p162
      // Predicated region
      $region29: #{_decoder_forward_impl.1} parent=5 // pred_check
        _
      $region30: #{_decoder_forward_impl.1} parent=5 // pred_check_branch
        %165 = sbr.rel (%p162) target = $region32
      $region31: #{_decoder_forward_impl.1} parent=5 // pred_region
        %s166 = ssub.s32 %s13, 1
        %s167 = sand.u32 %s26, 1
        %s168 = scalar_lea.sflag [#allocation3], %s167
        %s169 = sand.u32 %s26, 1
        %s170 = smul.addr %s169, 8
        %s171 = scalar_lea.vmem [#allocation2], %s170
        // Predicated region
        $region33: #{_decoder_forward_impl.1} parent=31 // pred_check
          %p172 = pneg %p39
        $region34: #{_decoder_forward_impl.1} parent=31 // pred_check_branch
          %174 = sbr.rel (%p172) target = $region36
        $region35: #{_decoder_forward_impl.1} parent=31 // pred_region
          %175 = dma.done %s168, 128
        $region36: #{_decoder_forward_impl.1} parent=31 // pred_fallthru
          _
        // Predicated region
        $region37: #{_decoder_forward_impl.1} parent=31 // pred_check
          %p176 = pneg %p60
        $region38: #{_decoder_forward_impl.1} parent=31 // pred_check_branch
          %178 = sbr.rel (%p176) target = $region40
        $region39: #{_decoder_forward_impl.1} parent=31 // pred_region
          %179 = dma.done [#allocation5], 512
        $region40: #{_decoder_forward_impl.1} parent=31 // pred_fallthru
          _
        %s180 = sand.u32 %s26, 1
        %s181 = scalar_lea.sflag [#allocation3], %s180
        %s182 = sand.u32 %s26, 1
        %s183 = smul.addr %s182, 8
        %s184 = scalar_lea.vmem [#allocation2], %s183
        %p185 = pneg %p39
        %p186 = pneg %p36
        %p187 = pneg %p60
        %p188 = pneg %p57
        %p189 = pneg %p81
        %p190 = pneg %p78
        %p191 = pneg %p107
        %p192 = pneg %p104
        %p193 = scmp.lt.s32.totalorder %s18, 1
        %s194 = scalar_select %p193, %s18, 1
        %s195 = smul.addr %s194, 8
        %s196 = scalar_lea.vmem %s3, %s195
        %p197 = scmp.lt.s32.totalorder %s18, 1
        %s198 = scalar_select %p197, %s18, 1
        %s199 = smul.addr %s198, 8
        %s200 = scalar_lea.vmem %s3, %s199
        %v201 = vld [vmem:[%s171] sm:$0xff]
        %v202 = vld [vmem:[#allocation4] sm:$0xff]
        %v203 = vld [vmem:[#allocation4 + $0x8] sm:$0xff]
        %v204 = vld [vmem:[#allocation4 + $0x10] sm:$0xff]
        %v205 = vld [vmem:[#allocation4 + $0x18] sm:$0xff]
        %v206 = vld [vmem:[%s2] sm:$0x1]
        %v208 = vlaneseq
        %v209 = vshrl.u32 %v208, 7
        %v210 = vsub.s32 0, %v209
        %v211 = vrot.slane %v206, %v210
        %vm213 = vcmask 261120
        %v215 = vsel %vm213, %v201, 0
        %217 = vmatprep.subr.mxu0 0.0
        %218 = vmatpush1.msra.mxu0 0.0
        %219 = vmatprep.subr.mxu0 0.0
        %220 = vmatpush1.msra.mxu0 0.0
        %221 = vmatprep.subr.mxu0 0.0
        %222 = vmatpush1.msra.mxu0 0.0
        %223 = vmatprep.subr.mxu0 0.0
        %224 = vmatpush1.msra.mxu0 0.0
        %225 = vmatprep.subr.mxu0 0.0
        %226 = vmatpush1.msra.mxu0 0.0
        %227 = vmatprep.subr.mxu0 0.0
        %228 = vmatpush1.msra.mxu0 0.0
        %229 = vmatprep.subr.mxu0 0.0
        %230 = vmatpush1.msra.mxu0 0.0
        %231 = vmatprep.subr.mxu0 0.0
        %232 = vmatpush1.msra.mxu0 0.0
        %233 = vmatprep.subr.mxu0 0.0
        %234 = vmatpush1.msra.mxu0 0.0
        %235 = vmatprep.subr.mxu0 0.0
        %236 = vmatpush1.msra.mxu0 0.0
        %237 = vmatprep.subr.mxu0 0.0
        %238 = vmatpush1.msra.mxu0 0.0
        %239 = vmatprep.subr.mxu0 0.0
        %240 = vmatpush1.msra.mxu0 0.0
        %241 = vmatprep.subr.mxu0 0.0
        %242 = vmatpush1.msra.mxu0 %v205
        %243 = vmatprep.subr.mxu0 0.0
        %244 = vmatpush1.msra.mxu0 %v204
        %245 = vmatprep.subr.mxu0 0.0
        %246 = vmatpush1.msra.mxu0 %v203
        %247 = vmatprep.subr.mxu0 0.0
        %248 = vmatpush1.msra.mxu0 %v202
        %249 = vmatprep.subr.mxu0 0.0
        %250 = vmatpush2.msra.mxu0 0.0
        %251 = vmatprep.subr.mxu0 0.0
        %252 = vmatpush2.msra.mxu0 0.0
        %253 = vmatprep.subr.mxu0 0.0
        %254 = vmatpush2.msra.mxu0 0.0
        %255 = vmatprep.subr.mxu0 0.0
        %256 = vmatpush2.msra.mxu0 0.0
        %257 = vmatprep.subr.mxu0 0.0
        %258 = vmatpush2.msra.mxu0 0.0
        %259 = vmatprep.subr.mxu0 0.0
        %260 = vmatpush2.msra.mxu0 0.0
        %261 = vmatprep.subr.mxu0 0.0
        %262 = vmatpush2.msra.mxu0 0.0
        %263 = vmatprep.subr.mxu0 0.0
        %264 = vmatpush2.msra.mxu0 0.0
        %265 = vmatprep.subr.mxu0 0.0
        %266 = vmatpush2.msra.mxu0 0.0
        %267 = vmatprep.subr.mxu0 0.0
        %268 = vmatpush2.msra.mxu0 0.0
        %269 = vmatprep.subr.mxu0 0.0
        %270 = vmatpush2.msra.mxu0 0.0
        %271 = vmatprep.subr.mxu0 0.0
        %272 = vmatpush2.msra.mxu0 0.0
        %273 = vmatprep.subr.mxu0 0.0
        %274 = vmatpush2.msra.mxu0 0.0
        %275 = vmatprep.subr.mxu0 0.0
        %276 = vmatpush2.msra.mxu0 0.0
        %277 = vmatprep.subr.mxu0 0.0
        %278 = vmatpush2.msra.mxu0 0.0
        %279 = vmatprep.subr.mxu0 0.0
        %280 = vmatpush2.msra.mxu0 0.0
        %281 = vmatprep.mubr.f32.mxu0 0.0
        %282 = vmatmul.mubr.f32.gmra.mxu0 %v215
        %v283 = vpop.f32.mrf.mxu0
        %v284 = vadd.f32 %v211, %v283
        %v285 = vpop.f32.mrf.mxu0
        %286 = vdwg.mxu0
        %287 = vmax.xlane.f32.xlu0 %v284
        %v288 = vpop.xlane.xlu0 %287
        %v289 = vsub.f32 %v284, %v288
        %v290 = vmul.f32 %v289, 1.442695
        %v291 = vpow.pop %v290
        %292 = vadd.xlane.f32.xlu0 %v291
        %v293 = vpop.xlane.xlu0 %292
        %v294 = vlog2.pop %v293
        %v295 = vmul.f32 %v294, 0.6931472
        %v296 = vsub.f32 %v289, %v295
        %297 = vst [vmem:[%s200] sm:$0xff] %v296
        %p298 = scmp.lt.s32.totalorder %s18, 1
        %s299 = scalar_select %p298, %s18, 1
        %s300 = smul.addr %s299, 8
        %s301 = scalar_lea.vmem %s3, %s300
        // Predicated region
        $region41: #{_decoder_forward_impl.1} parent=31 // pred_check
          %p302 = pneg %p104
        $region42: #{_decoder_forward_impl.1} parent=31 // pred_check_branch
          %304 = sbr.rel (%p302) target = $region44
        $region43: #{_decoder_forward_impl.1} parent=31 // pred_region
          _
        $region44: #{_decoder_forward_impl.1} parent=31 // pred_fallthru
          _
      $region32: #{_decoder_forward_impl.1} parent=5 // pred_fallthru
        _
      %p305 = scmp.le.s32.totalorder 2, %s13
      // Predicated region
      $region45: #{_decoder_forward_impl.1} parent=5 // pred_check
        %p306 = pneg %p305
      $region46: #{_decoder_forward_impl.1} parent=5 // pred_check_branch
        %308 = sbr.rel (%p306) target = $region48
      $region47: #{_decoder_forward_impl.1} parent=5 // pred_region
        %s309 = ssub.s32 %s13, 2
        // Predicated region
        $region49: #{_decoder_forward_impl.1} parent=47 // pred_check
          %p310 = pneg %p110
        $region50: #{_decoder_forward_impl.1} parent=47 // pred_check_branch
          %312 = sbr.rel (%p310) target = $region52
        $region51: #{_decoder_forward_impl.1} parent=47 // pred_region
          %p313 = scmp.lt.s32.totalorder %s19, 1
          %s314 = scalar_select %p313, %s19, 1
          %s315 = smul.addr %s314, 8
          %s316 = scalar_lea.vmem %s3, %s315
        $region52: #{_decoder_forward_impl.1} parent=47 // pred_fallthru
          _
      $region48: #{_decoder_forward_impl.1} parent=5 // pred_fallthru
        _
    $region6: #{_decoder_forward_impl.1} parent=1 // loop_footer
      %s17 = sadd.s32 1, %s13
    $region7: #{_decoder_forward_impl.1} parent=1 // loop_footer_branch
      %12 = sbr.rel target = $region3
    $region8: #{_decoder_forward_impl.1} parent=1 // loop_exit
      _
    %317 = vsyncpa [#allocation3], 1
    %s318 = scalar_lea.sflag [#allocation3], 1
    %319 = vsyncpa %s318, 1
    %320 = vsyncpa [#allocation5], 1

</llo_original>
